<compile_context>
chip_gen: v5e
topology: v5e:2x2
jax: 0.10.0
libtpu: 0.0.40
codegen_flags: <defaults>
</compile_context>

<pallas_src>
import functools

import jax
import jax.numpy as jnp
from jax.experimental import pallas as pl
from jax.experimental.pallas import tpu as pltpu


def _round_up(n, m):
    return ((n + m - 1) // m) * m


def _mlp_kernel(x_ref,
                w1_ref, b1_ref,
                w2_ref, b2_ref,
                w3_ref, b3_ref,
                w4_ref, b4_ref,
                o_ref):
    # One batch tile per grid step; all four matmuls + bias + ReLU fused.
    x = x_ref[...]

    h = jnp.dot(x, w1_ref[...], preferred_element_type=jnp.float32)
    h = jnp.maximum(h + b1_ref[...], 0.0)           # ReLU (dropout = identity)

    h = jnp.dot(h, w2_ref[...], preferred_element_type=jnp.float32)
    h = jnp.maximum(h + b2_ref[...], 0.0)           # ReLU (dropout = identity)

    h = jnp.dot(h, w3_ref[...], preferred_element_type=jnp.float32)
    h = jnp.maximum(h + b3_ref[...], 0.0)           # ReLU

    out = jnp.dot(h, w4_ref[...], preferred_element_type=jnp.float32)
    out = out + b4_ref[...]                         # (tb, out_channels)

    o_ref[...] = out.astype(o_ref.dtype)


@functools.partial(jax.jit, static_argnames=("block_batch",))
def mlp_localization_forward(x, params, *, block_batch=4096):
    """Fused MLP forward pass.

    x:      (batch, in_channels) float32
    params: dict with w1..w4 of shape (in, out) and b1..b4 of shape (1, out)
    """
    w1, b1 = params["w1"], params["b1"]
    w2, b2 = params["w2"], params["b2"]
    w3, b3 = params["w3"], params["b3"]
    w4, b4 = params["w4"], params["b4"]

    batch, in_features = x.shape
    out_channels = w4.shape[1]

    # --- batch tiling: sublane-aligned tile, ragged last block handled by
    # --- Pallas (no wrapper-side padding of x or of the output).
    tb = min(block_batch, _round_up(batch, 8))
    num_tiles = pl.cdiv(batch, tb)
    if num_tiles == 1 and batch > 256:
        # v7x has 2 TensorCores: keep >= 2 grid steps so the "parallel" batch
        # axis can shard across both cores instead of idling one of them.
        tb = _round_up(pl.cdiv(batch, 2), 8)
        num_tiles = pl.cdiv(batch, tb)

    # Weights/biases: constant index_map -> loaded once, VMEM-resident.
    resident = lambda a: pl.BlockSpec(a.shape, lambda i, _nd=a.ndim: (0,) * _nd)

    out = pl.pallas_call(
        _mlp_kernel,
        out_shape=jax.ShapeDtypeStruct((batch, out_channels), x.dtype),
        grid_spec=pltpu.PrefetchScalarGridSpec(
            num_scalar_prefetch=0,
            grid=(num_tiles,),
            in_specs=[
                # x streams per batch tile (auto double-buffered pipeline).
                pl.BlockSpec((tb, in_features), lambda i: (i, 0)),
                resident(w1), resident(b1),
                resident(w2), resident(b2),
                resident(w3), resident(b3),
                resident(w4), resident(b4),
            ],
            # Last block dim equals the full array dim (out_channels), so no
            # lane padding is required; out-of-range rows of the last ragged
            # batch tile are discarded by Pallas.
            out_specs=pl.BlockSpec((tb, out_channels), lambda i: (i, 0)),
        ),
        compiler_params=pltpu.CompilerParams(
            dimension_semantics=("parallel",),
        ),
    )(x, w1, b1, w2, b2, w3, b3, w4, b4)

    return out


def init_params(key, in_channels, hidden_channels=32, out_channels=2):
    """Deterministic parameter init mirroring nn.Linear shapes (stored transposed)."""
    dims = [
        (in_channels, hidden_channels),           # fc1
        (hidden_channels, hidden_channels),       # fc2
        (hidden_channels, hidden_channels // 2),  # fc3
        (hidden_channels // 2, out_channels),     # fc4
    ]
    params = {}
    for i, (fan_in, fan_out) in enumerate(dims, start=1):
        key, kw, kb = jax.random.split(key, 3)
        bound = 1.0 / (fan_in ** 0.5)
        params[f"w{i}"] = jax.random.uniform(
            kw, (fan_in, fan_out), jnp.float32, -bound, bound)
        params[f"b{i}"] = jax.random.uniform(
            kb, (1, fan_out), jnp.float32, -bound, bound)
    return params


def reference_forward(x, params):
    """Pure-JAX reference (dropout is identity in eval mode)."""
    h = jnp.maximum(x @ params["w1"] + params["b1"], 0.0)
    h = jnp.maximum(h @ params["w2"] + params["b2"], 0.0)
    h = jnp.maximum(h @ params["w3"] + params["b3"], 0.0)
    return h @ params["w4"] + params["b4"]


if __name__ == "__main__":
    key = jax.random.PRNGKey(0)
    k_x1, k_x2, k_p = jax.random.split(key, 3)

    in_channels, hidden_channels, out_channels = 16, 32, 2
    params = init_params(k_p, in_channels, hidden_channels, out_channels)

    # Small block_batch so the example actually exercises the tiled grid;
    # production sizes would use the default 4096.

    # 1) Evenly divisible batch (4 grid steps).
    x1 = jax.random.normal(k_x1, (64, in_channels), jnp.float32)
    out1 = jax.block_until_ready(mlp_localization_forward(x1, params, block_batch=16))
    ref1 = reference_forward(x1, params)
    assert out1.shape == (64, out_channels), out1.shape
    assert jnp.allclose(out1, ref1, atol=1e-5, rtol=1e-5), "mismatch vs reference (even)"

    # 2) Non-divisible batch -> ragged last block, no wrapper-side padding.
    x2 = jax.random.normal(k_x2, (100, in_channels), jnp.float32)
    out2 = jax.block_until_ready(mlp_localization_forward(x2, params, block_batch=16))
    ref2 = reference_forward(x2, params)
    assert out2.shape == (100, out_channels), out2.shape
    assert jnp.allclose(out2, ref2, atol=1e-5, rtol=1e-5), "mismatch vs reference (ragged)"

    print("KERNEL_OK")
</pallas_src>

<mosaic_0001>
module attributes {stable_mosaic.version = 11 : i64} {
  func.func @_mlp_kernel(%arg0: i32, %arg1: memref<16x16xf32, #tpu.memory_space<vmem>>, %arg2: memref<16x32xf32, #tpu.memory_space<vmem>>, %arg3: memref<1x32xf32, #tpu.memory_space<vmem>>, %arg4: memref<32x32xf32, #tpu.memory_space<vmem>>, %arg5: memref<1x32xf32, #tpu.memory_space<vmem>>, %arg6: memref<32x16xf32, #tpu.memory_space<vmem>>, %arg7: memref<1x16xf32, #tpu.memory_space<vmem>>, %arg8: memref<16x2xf32, #tpu.memory_space<vmem>>, %arg9: memref<1x2xf32, #tpu.memory_space<vmem>>, %arg10: memref<16x2xf32, #tpu.memory_space<vmem>>) attributes {dimension_semantics = [#tpu.dimension_semantics<parallel>], iteration_bounds = array<i64: 4>, scalar_prefetch = 0 : i64, scratch_operands = 0 : i64, tpu.core_type = #tpu.core_type<tc>, window_params = [{transform_indices = @transform_0, window_bounds = array<i64: 16, 16>}, {pipeline_mode = #tpu.pipeline_mode<synchronous>, transform_indices = @transform_1, window_bounds = array<i64: 16, 32>}, {pipeline_mode = #tpu.pipeline_mode<synchronous>, transform_indices = @transform_2, window_bounds = array<i64: 1, 32>}, {pipeline_mode = #tpu.pipeline_mode<synchronous>, transform_indices = @transform_3, window_bounds = array<i64: 32, 32>}, {pipeline_mode = #tpu.pipeline_mode<synchronous>, transform_indices = @transform_4, window_bounds = array<i64: 1, 32>}, {pipeline_mode = #tpu.pipeline_mode<synchronous>, transform_indices = @transform_5, window_bounds = array<i64: 32, 16>}, {pipeline_mode = #tpu.pipeline_mode<synchronous>, transform_indices = @transform_6, window_bounds = array<i64: 1, 16>}, {pipeline_mode = #tpu.pipeline_mode<synchronous>, transform_indices = @transform_7, window_bounds = array<i64: 16, 2>}, {pipeline_mode = #tpu.pipeline_mode<synchronous>, transform_indices = @transform_8, window_bounds = array<i64: 1, 2>}, {transform_indices = @transform_9, window_bounds = array<i64: 16, 2>}]} {
    %c0 = arith.constant 0 : index
    %c0_0 = arith.constant 0 : index
    %0 = vector.load %arg1[%c0, %c0_0] : memref<16x16xf32, #tpu.memory_space<vmem>>, vector<16x16xf32>
    %c0_1 = arith.constant 0 : index
    %c0_2 = arith.constant 0 : index
    %1 = vector.load %arg2[%c0_1, %c0_2] : memref<16x32xf32, #tpu.memory_space<vmem>>, vector<16x32xf32>
    %cst = arith.constant dense<0.000000e+00> : vector<16x32xf32>
    %2 = tpu.matmul %0, %1, %cst {dimension_numbers = #tpu.dot_dimension_numbers<[1], [0], [0], [1], [0, 0, 1, 1], [], []>} : vector<16x16xf32>, vector<16x32xf32>, vector<16x32xf32> -> vector<16x32xf32>
    %c0_3 = arith.constant 0 : index
    %c0_4 = arith.constant 0 : index
    %3 = vector.load %arg3[%c0_3, %c0_4] : memref<1x32xf32, #tpu.memory_space<vmem>>, vector<1x32xf32>
    %4 = vector.broadcast %3 : vector<1x32xf32> to vector<16x32xf32>
    %5 = arith.addf %2, %4 : vector<16x32xf32>
    %cst_5 = arith.constant 0.000000e+00 : f32
    %6 = vector.broadcast %cst_5 : f32 to vector<16x32xf32>
    %7 = arith.maximumf %5, %6 : vector<16x32xf32>
    %c0_6 = arith.constant 0 : index
    %c0_7 = arith.constant 0 : index
    %8 = vector.load %arg4[%c0_6, %c0_7] : memref<32x32xf32, #tpu.memory_space<vmem>>, vector<32x32xf32>
    %cst_8 = arith.constant dense<0.000000e+00> : vector<16x32xf32>
    %9 = tpu.matmul %7, %8, %cst_8 {dimension_numbers = #tpu.dot_dimension_numbers<[1], [0], [0], [1], [0, 0, 1, 1], [], []>} : vector<16x32xf32>, vector<32x32xf32>, vector<16x32xf32> -> vector<16x32xf32>
    %c0_9 = arith.constant 0 : index
    %c0_10 = arith.constant 0 : index
    %10 = vector.load %arg5[%c0_9, %c0_10] : memref<1x32xf32, #tpu.memory_space<vmem>>, vector<1x32xf32>
    %11 = vector.broadcast %10 : vector<1x32xf32> to vector<16x32xf32>
    %12 = arith.addf %9, %11 : vector<16x32xf32>
    %cst_11 = arith.constant 0.000000e+00 : f32
    %13 = vector.broadcast %cst_11 : f32 to vector<16x32xf32>
    %14 = arith.maximumf %12, %13 : vector<16x32xf32>
    %c0_12 = arith.constant 0 : index
    %c0_13 = arith.constant 0 : index
    %15 = vector.load %arg6[%c0_12, %c0_13] : memref<32x16xf32, #tpu.memory_space<vmem>>, vector<32x16xf32>
    %cst_14 = arith.constant dense<0.000000e+00> : vector<16x16xf32>
    %16 = tpu.matmul %14, %15, %cst_14 {dimension_numbers = #tpu.dot_dimension_numbers<[1], [0], [0], [1], [0, 0, 1, 1], [], []>} : vector<16x32xf32>, vector<32x16xf32>, vector<16x16xf32> -> vector<16x16xf32>
    %c0_15 = arith.constant 0 : index
    %c0_16 = arith.constant 0 : index
    %17 = vector.load %arg7[%c0_15, %c0_16] : memref<1x16xf32, #tpu.memory_space<vmem>>, vector<1x16xf32>
    %18 = vector.broadcast %17 : vector<1x16xf32> to vector<16x16xf32>
    %19 = arith.addf %16, %18 : vector<16x16xf32>
    %cst_17 = arith.constant 0.000000e+00 : f32
    %20 = vector.broadcast %cst_17 : f32 to vector<16x16xf32>
    %21 = arith.maximumf %19, %20 : vector<16x16xf32>
    %c0_18 = arith.constant 0 : index
    %c0_19 = arith.constant 0 : index
    %22 = vector.load %arg8[%c0_18, %c0_19] : memref<16x2xf32, #tpu.memory_space<vmem>>, vector<16x2xf32>
    %cst_20 = arith.constant dense<0.000000e+00> : vector<16x2xf32>
    %23 = tpu.matmul %21, %22, %cst_20 {dimension_numbers = #tpu.dot_dimension_numbers<[1], [0], [0], [1], [0, 0, 1, 1], [], []>} : vector<16x16xf32>, vector<16x2xf32>, vector<16x2xf32> -> vector<16x2xf32>
    %c0_21 = arith.constant 0 : index
    %c0_22 = arith.constant 0 : index
    %24 = vector.load %arg9[%c0_21, %c0_22] : memref<1x2xf32, #tpu.memory_space<vmem>>, vector<1x2xf32>
    %25 = vector.broadcast %24 : vector<1x2xf32> to vector<16x2xf32>
    %26 = arith.addf %23, %25 : vector<16x2xf32>
    %c0_23 = arith.constant 0 : index
    %c0_24 = arith.constant 0 : index
    %27 = vector.load %arg10[%c0_23, %c0_24] : memref<16x2xf32, #tpu.memory_space<vmem>>, vector<16x2xf32>
    tpu.vector_store %arg10[%c0_23, %c0_24], %26 {strides = array<i32>} : memref<16x2xf32, #tpu.memory_space<vmem>>, vector<16x2xf32>,
    return
  }
  func.func @transform_0(%arg0: i32) -> (i32, i32) {
    %c0_i32 = arith.constant 0 : i32
    %c0_i32_0 = arith.constant 0 : i32
    return %arg0, %c0_i32 : i32, i32
  }
  func.func @transform_1(%arg0: i32) -> (i32, i32) {
    %c0_i32 = arith.constant 0 : i32
    %c0_i32_0 = arith.constant 0 : i32
    %c0_i32_1 = arith.constant 0 : i32
    return %c0_i32, %c0_i32_0 : i32, i32
  }
  func.func @transform_2(%arg0: i32) -> (i32, i32) {
    %c0_i32 = arith.constant 0 : i32
    %c0_i32_0 = arith.constant 0 : i32
    %c0_i32_1 = arith.constant 0 : i32
    return %c0_i32, %c0_i32_0 : i32, i32
  }
  func.func @transform_3(%arg0: i32) -> (i32, i32) {
    %c0_i32 = arith.constant 0 : i32
    %c0_i32_0 = arith.constant 0 : i32
    %c0_i32_1 = arith.constant 0 : i32
    return %c0_i32, %c0_i32_0 : i32, i32
  }
  func.func @transform_4(%arg0: i32) -> (i32, i32) {
    %c0_i32 = arith.constant 0 : i32
    %c0_i32_0 = arith.constant 0 : i32
    %c0_i32_1 = arith.constant 0 : i32
    return %c0_i32, %c0_i32_0 : i32, i32
  }
  func.func @transform_5(%arg0: i32) -> (i32, i32) {
    %c0_i32 = arith.constant 0 : i32
    %c0_i32_0 = arith.constant 0 : i32
    %c0_i32_1 = arith.constant 0 : i32
    return %c0_i32, %c0_i32_0 : i32, i32
  }
  func.func @transform_6(%arg0: i32) -> (i32, i32) {
    %c0_i32 = arith.constant 0 : i32
    %c0_i32_0 = arith.constant 0 : i32
    %c0_i32_1 = arith.constant 0 : i32
    return %c0_i32, %c0_i32_0 : i32, i32
  }
  func.func @transform_7(%arg0: i32) -> (i32, i32) {
    %c0_i32 = arith.constant 0 : i32
    %c0_i32_0 = arith.constant 0 : i32
    %c0_i32_1 = arith.constant 0 : i32
    return %c0_i32, %c0_i32_0 : i32, i32
  }
  func.func @transform_8(%arg0: i32) -> (i32, i32) {
    %c0_i32 = arith.constant 0 : i32
    %c0_i32_0 = arith.constant 0 : i32
    %c0_i32_1 = arith.constant 0 : i32
    return %c0_i32, %c0_i32_0 : i32, i32
  }
  func.func @transform_9(%arg0: i32) -> (i32, i32) {
    %c0_i32 = arith.constant 0 : i32
    %c0_i32_0 = arith.constant 0 : i32
    return %arg0, %c0_i32 : i32, i32
  }
}

</mosaic_0001>

<llo_original>
// kernel: mlp_localization_forward.1
$region0: #{mlp_localization_forward.1}
  #allocation0 [shape = 'u32[]', space=smem, size = 0x4, offset = 0x4, fixed_abs, tag = 'smem constant byte address 0x4 - core index']
  #allocation1 [shape = 'u32[72,128]{1,0:T(1,128)}', space=vmem, size = 0x9000, scoped, tag = 'internal scratch']
  %s0 = inlined_call_operand.vmem [shape: f32[64,16], index: 0, kind: input, shape index: {}]
  %s1 = inlined_call_operand.vmem [shape: f32[16,32], index: 1, kind: input, shape index: {}]
  %s2 = inlined_call_operand.vmem [shape: f32[1,32], index: 2, kind: input, shape index: {}]
  %s3 = inlined_call_operand.vmem [shape: f32[32,32], index: 3, kind: input, shape index: {}]
  %s4 = inlined_call_operand.vmem [shape: f32[1,32], index: 4, kind: input, shape index: {}]
  %s5 = inlined_call_operand.vmem [shape: f32[32,16], index: 5, kind: input, shape index: {}]
  %s6 = inlined_call_operand.vmem [shape: f32[1,16], index: 6, kind: input, shape index: {}]
  %s7 = inlined_call_operand.vmem [shape: f32[16,2], index: 7, kind: input, shape index: {}]
  %s8 = inlined_call_operand.vmem [shape: f32[1,2], index: 8, kind: input, shape index: {}]
  %s9 = inlined_call_operand.vmem [shape: f32[64,2], index: 9, kind: output, shape index: {}]
  %s10 = sld [smem:[#allocation0]]
  $region69: #{mlp_localization_forward.1} parent=0
    _
  %s12 = ssub.s32 1, %s10
  %s13 = scalar_select 0, %s12, %s10
  loop: start=0, step=1, limit=6
  $region2: #{mlp_localization_forward.1} parent=0 // loop_pre_header
    _
  $region3: #{mlp_localization_forward.1} parent=0 // loop_header
    %s15 = sphi 0, %s19
    %p16 = scmp.ge.s32.totalorder %s15, 6
    %s25 = sphi 0, %s27
    %s28 = sphi 0, %s25
    %s29 = sphi 0, %s28
    %s45 = sphi 0, %s29
    %s49 = sphi 0, %s49
    %s51 = sphi 0, %s49
    %s52 = sphi 0, %s51
    %s66 = sphi 0, %s52
    %s70 = sphi 0, %s70
    %s72 = sphi 0, %s70
    %s73 = sphi 0, %s72
    %s87 = sphi 0, %s73
    %s91 = sphi 0, %s91
    %s93 = sphi 0, %s91
    %s94 = sphi 0, %s93
    %s108 = sphi 0, %s94
    %s112 = sphi 0, %s112
    %s114 = sphi 0, %s112
    %s115 = sphi 0, %s114
    %s129 = sphi 0, %s115
    %s133 = sphi 0, %s133
    %s135 = sphi 0, %s133
    %s136 = sphi 0, %s135
    %s150 = sphi 0, %s136
    %s154 = sphi 0, %s154
    %s156 = sphi 0, %s154
    %s157 = sphi 0, %s156
    %s171 = sphi 0, %s157
    %s175 = sphi 0, %s175
    %s177 = sphi 0, %s175
    %s178 = sphi 0, %s177
    %s192 = sphi 0, %s178
    %s196 = sphi 0, %s196
    %s198 = sphi 0, %s196
    %s199 = sphi 0, %s198
    %s213 = sphi 0, %s199
    %s219 = sphi 0, %s221
    %s222 = sphi 0, %s219
    %s223 = sphi 0, %s222
    %s239 = sphi 0, %s223
  $region4: #{mlp_localization_forward.1} parent=0 // loop_header_branch
    %18 = sbr.rel (%p16) target = $region8
  $region5: #{mlp_localization_forward.1} parent=0 // loop_body
    %s20 = ssub.s32 %s15, 1
    %s21 = ssub.s32 %s15, 2
    %s22 = sadd.s32 %s15, 1
    %s23 = ssub.s32 %s15, %s22
    %p24 = scmp.eq.s32.totalorder %s23, 0
    %s26 = sadd.s32 %s25, 1
    %s27 = scalar_select %p24, %s25, %s26
    %p30 = pneg %p24
    %p31 = scmp.eq.s32.totalorder %s15, 3
    %p32 = por %p30, %p31
    %p33 = scmp.ne.s32.totalorder %s25, %s28
    %p34 = scmp.eq.s32.totalorder %s15, 0
    %p35 = por %p33, %p34
    %p36 = scmp.ne.s32.totalorder %s25, %s28
    %p37 = scmp.eq.s32.totalorder %s20, 3
    %p38 = por %p36, %p37
    %p39 = scmp.ne.s32.totalorder %s28, %s29
    %p40 = scmp.eq.s32.totalorder %s20, 0
    %p41 = por %p39, %p40
    %p42 = scmp.ne.s32.totalorder %s28, %s29
    %p43 = scmp.eq.s32.totalorder %s21, 3
    %p44 = por %p42, %p43
    %p46 = scmp.ne.s32.totalorder %s29, %s45
    %p47 = scmp.eq.s32.totalorder %s21, 0
    %p48 = por %p46, %p47
    %s50 = sadd.s32 %s49, 1
    %p53 = scmp.eq.s32.totalorder %s15, 3
    %p54 = scmp.ne.s32.totalorder %s49, %s51
    %p55 = scmp.eq.s32.totalorder %s15, 0
    %p56 = por %p54, %p55
    %p57 = scmp.ne.s32.totalorder %s49, %s51
    %p58 = scmp.eq.s32.totalorder %s20, 3
    %p59 = por %p57, %p58
    %p60 = scmp.ne.s32.totalorder %s51, %s52
    %p61 = scmp.eq.s32.totalorder %s20, 0
    %p62 = por %p60, %p61
    %p63 = scmp.ne.s32.totalorder %s51, %s52
    %p64 = scmp.eq.s32.totalorder %s21, 3
    %p65 = por %p63, %p64
    %p67 = scmp.ne.s32.totalorder %s52, %s66
    %p68 = scmp.eq.s32.totalorder %s21, 0
    %p69 = por %p67, %p68
    %s71 = sadd.s32 %s70, 1
    %p74 = scmp.eq.s32.totalorder %s15, 3
    %p75 = scmp.ne.s32.totalorder %s70, %s72
    %p76 = scmp.eq.s32.totalorder %s15, 0
    %p77 = por %p75, %p76
    %p78 = scmp.ne.s32.totalorder %s70, %s72
    %p79 = scmp.eq.s32.totalorder %s20, 3
    %p80 = por %p78, %p79
    %p81 = scmp.ne.s32.totalorder %s72, %s73
    %p82 = scmp.eq.s32.totalorder %s20, 0
    %p83 = por %p81, %p82
    %p84 = scmp.ne.s32.totalorder %s72, %s73
    %p85 = scmp.eq.s32.totalorder %s21, 3
    %p86 = por %p84, %p85
    %p88 = scmp.ne.s32.totalorder %s73, %s87
    %p89 = scmp.eq.s32.totalorder %s21, 0
    %p90 = por %p88, %p89
    %s92 = sadd.s32 %s91, 1
    %p95 = scmp.eq.s32.totalorder %s15, 3
    %p96 = scmp.ne.s32.totalorder %s91, %s93
    %p97 = scmp.eq.s32.totalorder %s15, 0
    %p98 = por %p96, %p97
    %p99 = scmp.ne.s32.totalorder %s91, %s93
    %p100 = scmp.eq.s32.totalorder %s20, 3
    %p101 = por %p99, %p100
    %p102 = scmp.ne.s32.totalorder %s93, %s94
    %p103 = scmp.eq.s32.totalorder %s20, 0
    %p104 = por %p102, %p103
    %p105 = scmp.ne.s32.totalorder %s93, %s94
    %p106 = scmp.eq.s32.totalorder %s21, 3
    %p107 = por %p105, %p106
    %p109 = scmp.ne.s32.totalorder %s94, %s108
    %p110 = scmp.eq.s32.totalorder %s21, 0
    %p111 = por %p109, %p110
    %s113 = sadd.s32 %s112, 1
    %p116 = scmp.eq.s32.totalorder %s15, 3
    %p117 = scmp.ne.s32.totalorder %s112, %s114
    %p118 = scmp.eq.s32.totalorder %s15, 0
    %p119 = por %p117, %p118
    %p120 = scmp.ne.s32.totalorder %s112, %s114
    %p121 = scmp.eq.s32.totalorder %s20, 3
    %p122 = por %p120, %p121
    %p123 = scmp.ne.s32.totalorder %s114, %s115
    %p124 = scmp.eq.s32.totalorder %s20, 0
    %p125 = por %p123, %p124
    %p126 = scmp.ne.s32.totalorder %s114, %s115
    %p127 = scmp.eq.s32.totalorder %s21, 3
    %p128 = por %p126, %p127
    %p130 = scmp.ne.s32.totalorder %s115, %s129
    %p131 = scmp.eq.s32.totalorder %s21, 0
    %p132 = por %p130, %p131
    %s134 = sadd.s32 %s133, 1
    %p137 = scmp.eq.s32.totalorder %s15, 3
    %p138 = scmp.ne.s32.totalorder %s133, %s135
    %p139 = scmp.eq.s32.totalorder %s15, 0
    %p140 = por %p138, %p139
    %p141 = scmp.ne.s32.totalorder %s133, %s135
    %p142 = scmp.eq.s32.totalorder %s20, 3
    %p143 = por %p141, %p142
    %p144 = scmp.ne.s32.totalorder %s135, %s136
    %p145 = scmp.eq.s32.totalorder %s20, 0
    %p146 = por %p144, %p145
    %p147 = scmp.ne.s32.totalorder %s135, %s136
    %p148 = scmp.eq.s32.totalorder %s21, 3
    %p149 = por %p147, %p148
    %p151 = scmp.ne.s32.totalorder %s136, %s150
    %p152 = scmp.eq.s32.totalorder %s21, 0
    %p153 = por %p151, %p152
    %s155 = sadd.s32 %s154, 1
    %p158 = scmp.eq.s32.totalorder %s15, 3
    %p159 = scmp.ne.s32.totalorder %s154, %s156
    %p160 = scmp.eq.s32.totalorder %s15, 0
    %p161 = por %p159, %p160
    %p162 = scmp.ne.s32.totalorder %s154, %s156
    %p163 = scmp.eq.s32.totalorder %s20, 3
    %p164 = por %p162, %p163
    %p165 = scmp.ne.s32.totalorder %s156, %s157
    %p166 = scmp.eq.s32.totalorder %s20, 0
    %p167 = por %p165, %p166
    %p168 = scmp.ne.s32.totalorder %s156, %s157
    %p169 = scmp.eq.s32.totalorder %s21, 3
    %p170 = por %p168, %p169
    %p172 = scmp.ne.s32.totalorder %s157, %s171
    %p173 = scmp.eq.s32.totalorder %s21, 0
    %p174 = por %p172, %p173
    %s176 = sadd.s32 %s175, 1
    %p179 = scmp.eq.s32.totalorder %s15, 3
    %p180 = scmp.ne.s32.totalorder %s175, %s177
    %p181 = scmp.eq.s32.totalorder %s15, 0
    %p182 = por %p180, %p181
    %p183 = scmp.ne.s32.totalorder %s175, %s177
    %p184 = scmp.eq.s32.totalorder %s20, 3
    %p185 = por %p183, %p184
    %p186 = scmp.ne.s32.totalorder %s177, %s178
    %p187 = scmp.eq.s32.totalorder %s20, 0
    %p188 = por %p186, %p187
    %p189 = scmp.ne.s32.totalorder %s177, %s178
    %p190 = scmp.eq.s32.totalorder %s21, 3
    %p191 = por %p189, %p190
    %p193 = scmp.ne.s32.totalorder %s178, %s192
    %p194 = scmp.eq.s32.totalorder %s21, 0
    %p195 = por %p193, %p194
    %s197 = sadd.s32 %s196, 1
    %p200 = scmp.eq.s32.totalorder %s15, 3
    %p201 = scmp.ne.s32.totalorder %s196, %s198
    %p202 = scmp.eq.s32.totalorder %s15, 0
    %p203 = por %p201, %p202
    %p204 = scmp.ne.s32.totalorder %s196, %s198
    %p205 = scmp.eq.s32.totalorder %s20, 3
    %p206 = por %p204, %p205
    %p207 = scmp.ne.s32.totalorder %s198, %s199
    %p208 = scmp.eq.s32.totalorder %s20, 0
    %p209 = por %p207, %p208
    %p210 = scmp.ne.s32.totalorder %s198, %s199
    %p211 = scmp.eq.s32.totalorder %s21, 3
    %p212 = por %p210, %p211
    %p214 = scmp.ne.s32.totalorder %s199, %s213
    %p215 = scmp.eq.s32.totalorder %s21, 0
    %p216 = por %p214, %p215
    %s217 = ssub.s32 %s15, %s22
    %p218 = scmp.eq.s32.totalorder %s217, 0
    %s220 = sadd.s32 %s219, 1
    %s221 = scalar_select %p218, %s219, %s220
    %p224 = pneg %p218
    %p225 = scmp.eq.s32.totalorder %s15, 3
    %p226 = por %p224, %p225
    %p227 = scmp.ne.s32.totalorder %s219, %s222
    %p228 = scmp.eq.s32.totalorder %s15, 0
    %p229 = por %p227, %p228
    %p230 = scmp.ne.s32.totalorder %s219, %s222
    %p231 = scmp.eq.s32.totalorder %s20, 3
    %p232 = por %p230, %p231
    %p233 = scmp.ne.s32.totalorder %s222, %s223
    %p234 = scmp.eq.s32.totalorder %s20, 0
    %p235 = por %p233, %p234
    %p236 = scmp.ne.s32.totalorder %s222, %s223
    %p237 = scmp.eq.s32.totalorder %s21, 3
    %p238 = por %p236, %p237
    %p240 = scmp.ne.s32.totalorder %s223, %s239
    %p241 = scmp.eq.s32.totalorder %s21, 0
    %p242 = por %p240, %p241
    %p243 = scmp.le.s32.totalorder 1, %s15
    %p244 = scmp.lt.s32.totalorder %s15, 5
    %p245 = pnand %p243, %p244
    %p246 = pneg %p245
    // Predicated region
    $region9: #{mlp_localization_forward.1} parent=5 // pred_check
      _
    $region10: #{mlp_localization_forward.1} parent=5 // pred_check_branch
      %248 = sbr.rel (%p245) target = $region12
    $region11: #{mlp_localization_forward.1} parent=5 // pred_region
      %s249 = ssub.s32 %s15, 1
      // Predicated region
      $region13: #{mlp_localization_forward.1} parent=11 // pred_check
        %p250 = pneg %p62
      $region14: #{mlp_localization_forward.1} parent=11 // pred_check_branch
        %252 = sbr.rel (%p250) target = $region16
      $region15: #{mlp_localization_forward.1} parent=11 // pred_region
        _
      $region16: #{mlp_localization_forward.1} parent=11 // pred_fallthru
        _
      // Predicated region
      $region17: #{mlp_localization_forward.1} parent=11 // pred_check
        %p253 = pneg %p83
      $region18: #{mlp_localization_forward.1} parent=11 // pred_check_branch
        %255 = sbr.rel (%p253) target = $region20
      $region19: #{mlp_localization_forward.1} parent=11 // pred_region
        _
      $region20: #{mlp_localization_forward.1} parent=11 // pred_fallthru
        _
      // Predicated region
      $region21: #{mlp_localization_forward.1} parent=11 // pred_check
        %p256 = pneg %p104
      $region22: #{mlp_localization_forward.1} parent=11 // pred_check_branch
        %258 = sbr.rel (%p256) target = $region24
      $region23: #{mlp_localization_forward.1} parent=11 // pred_region
        _
      $region24: #{mlp_localization_forward.1} parent=11 // pred_fallthru
        _
      // Predicated region
      $region25: #{mlp_localization_forward.1} parent=11 // pred_check
        %p259 = pneg %p125
      $region26: #{mlp_localization_forward.1} parent=11 // pred_check_branch
        %261 = sbr.rel (%p259) target = $region28
      $region27: #{mlp_localization_forward.1} parent=11 // pred_region
        _
      $region28: #{mlp_localization_forward.1} parent=11 // pred_fallthru
        _
      // Predicated region
      $region29: #{mlp_localization_forward.1} parent=11 // pred_check
        %p262 = pneg %p146
      $region30: #{mlp_localization_forward.1} parent=11 // pred_check_branch
        %264 = sbr.rel (%p262) target = $region32
      $region31: #{mlp_localization_forward.1} parent=11 // pred_region
        _
      $region32: #{mlp_localization_forward.1} parent=11 // pred_fallthru
        _
      // Predicated region
      $region33: #{mlp_localization_forward.1} parent=11 // pred_check
        %p265 = pneg %p167
      $region34: #{mlp_localization_forward.1} parent=11 // pred_check_branch
        %267 = sbr.rel (%p265) target = $region36
      $region35: #{mlp_localization_forward.1} parent=11 // pred_region
        _
      $region36: #{mlp_localization_forward.1} parent=11 // pred_fallthru
        _
      // Predicated region
      $region37: #{mlp_localization_forward.1} parent=11 // pred_check
        %p268 = pneg %p188
      $region38: #{mlp_localization_forward.1} parent=11 // pred_check_branch
        %270 = sbr.rel (%p268) target = $region40
      $region39: #{mlp_localization_forward.1} parent=11 // pred_region
        _
      $region40: #{mlp_localization_forward.1} parent=11 // pred_fallthru
        _
      // Predicated region
      $region41: #{mlp_localization_forward.1} parent=11 // pred_check
        %p271 = pneg %p209
      $region42: #{mlp_localization_forward.1} parent=11 // pred_check_branch
        %273 = sbr.rel (%p271) target = $region44
      $region43: #{mlp_localization_forward.1} parent=11 // pred_region
        _
      $region44: #{mlp_localization_forward.1} parent=11 // pred_fallthru
        _
    $region12: #{mlp_localization_forward.1} parent=5 // pred_fallthru
      _
    %p274 = scmp.lt.s32.totalorder %s15, 4
    // Predicated region
    $region45: #{mlp_localization_forward.1} parent=5 // pred_check
      %p275 = pneg %p274
    $region46: #{mlp_localization_forward.1} parent=5 // pred_check_branch
      %277 = sbr.rel (%p275) target = $region48
    $region47: #{mlp_localization_forward.1} parent=5 // pred_region
      // Predicated region
      $region49: #{mlp_localization_forward.1} parent=47 // pred_check
        %p278 = pneg %p35
      $region50: #{mlp_localization_forward.1} parent=47 // pred_check_branch
        %280 = sbr.rel (%p278) target = $region52
      $region51: #{mlp_localization_forward.1} parent=47 // pred_region
        %s281 = smul.u32 2, %s15
        %p282 = scmp.lt.s32.totalorder %s281, 7
        %s283 = scalar_select %p282, %s281, 7
        %s284 = smul.addr %s283, 8
        %s285 = scalar_lea.vmem %s0, %s284
        %s286 = smul.u32 2, %s15
      $region52: #{mlp_localization_forward.1} parent=47 // pred_fallthru
        _
    $region48: #{mlp_localization_forward.1} parent=5 // pred_fallthru
      _
    %p287 = scmp.le.s32.totalorder 1, %s15
    %p288 = scmp.lt.s32.totalorder %s15, 5
    %p289 = pnand %p287, %p288
    %p290 = pneg %p289
    // Predicated region
    $region53: #{mlp_localization_forward.1} parent=5 // pred_check
      _
    $region54: #{mlp_localization_forward.1} parent=5 // pred_check_branch
      %292 = sbr.rel (%p289) target = $region56
    $region55: #{mlp_localization_forward.1} parent=5 // pred_region
      %s293 = ssub.s32 %s15, 1
      %s294 = smul.u32 2, %s20
      %p295 = scmp.lt.s32.totalorder %s294, 7
      %s296 = scalar_select %p295, %s294, 7
      %s297 = smul.addr %s296, 8
      %s298 = scalar_lea.vmem %s0, %s297
      %p299 = pneg %p41
      %p300 = pneg %p38
      %p301 = pneg %p62
      %p302 = pneg %p59
      %p303 = pneg %p83
      %p304 = pneg %p80
      %p305 = pneg %p104
      %p306 = pneg %p101
      %p307 = pneg %p125
      %p308 = pneg %p122
      %p309 = pneg %p146
      %p310 = pneg %p143
      %p311 = pneg %p167
      %p312 = pneg %p164
      %p313 = pneg %p188
      %p314 = pneg %p185
      %p315 = pneg %p209
      %p316 = pneg %p206
      %p317 = pneg %p235
      %p318 = pneg %p232
      %s319 = smul.u32 2, %s20
      %p320 = scmp.lt.s32.totalorder %s319, 7
      %s321 = scalar_select %p320, %s319, 7
      %s322 = smul.addr %s321, 8
      %s323 = scalar_lea.vmem %s9, %s322
      %s324 = smul.u32 2, %s20
      %p325 = scmp.lt.s32.totalorder %s324, 7
      %s326 = scalar_select %p325, %s324, 7
      %s327 = smul.addr %s326, 8
      %s328 = scalar_lea.vmem %s0, %s327
      %s329 = smul.u32 2, %s20
      %s330 = smul.u32 2, %s20
      %p331 = scmp.lt.s32.totalorder %s330, 7
      %s332 = scalar_select %p331, %s330, 7
      %s333 = smul.addr %s332, 8
      %s334 = scalar_lea.vmem %s9, %s333
      %s335 = smul.u32 2, %s20
      %v336 = vld [vmem:[%s328] sm:$0xff]
      %v337 = vld [vmem:[%s328 + $0x8] sm:$0xff]
      %v338 = vld [vmem:[%s1] sm:$0xff]
      %v339 = vld [vmem:[%s1 + $0x8] sm:$0xff]
      %v340 = vld [vmem:[%s2] sm:$0x1]
      %v342 = vperm.slane %v340, 0
      %vm344 = vcmask 130048
      %v346 = vsel %vm344, %v336, 0
      %v349 = vsel %vm344, %v337, 0
      %351 = vmatpush.msra.mxu0 0.0
      %352 = vmatpush.msra.mxu0 0.0
      %353 = vmatpush.msra.mxu0 0.0
      %354 = vmatpush.msra.mxu0 0.0
      %355 = vmatpush.msra.mxu0 0.0
      %356 = vmatpush.msra.mxu0 0.0
      %357 = vmatpush.msra.mxu0 0.0
      %358 = vmatpush.msra.mxu0 0.0
      %359 = vmatpush.msra.mxu0 0.0
      %360 = vmatpush.msra.mxu0 0.0
      %361 = vmatpush.msra.mxu0 0.0
      %362 = vmatpush.msra.mxu0 0.0
      %363 = vmatpush.msra.mxu0 0.0
      %364 = vmatpush.msra.mxu0 0.0
      %365 = vmatpush.msra.mxu0 %v339
      %366 = vmatpush.msra.mxu0 %v338
      %367 = vmatmul.f32.gmra.mxu0 %v346
      %v368 = vpop.f32.mrf.mxu0
      %v369 = vadd.f32 %v342, %v368
      %370 = vmatmul.f32.gmra.mxu0 %v349
      %v371 = vpop.f32.mrf.mxu0
      %v372 = vadd.f32 %v342, %v371
      %373 = vdwg.mxu0
      %v374 = vmax.f32 %v369, 0.0
      %v375 = vmax.f32 %v372, 0.0
      %v376 = vld [vmem:[%s3] sm:$0xff]
      %v377 = vld [vmem:[%s3 + $0x8] sm:$0xff]
      %v378 = vld [vmem:[%s3 + $0x10] sm:$0xff]
      %v379 = vld [vmem:[%s3 + $0x18] sm:$0xff]
      %v380 = vld [vmem:[%s4] sm:$0x1]
      %v382 = vperm.slane %v380, 0
      %vm384 = vcmask 261120
      %v386 = vsel %vm384, %v374, 0
      %v389 = vsel %vm384, %v375, 0
      %391 = vmatpush.msra.mxu0 0.0
      %392 = vmatpush.msra.mxu0 0.0
      %393 = vmatpush.msra.mxu0 0.0
      %394 = vmatpush.msra.mxu0 0.0
      %395 = vmatpush.msra.mxu0 0.0
      %396 = vmatpush.msra.mxu0 0.0
      %397 = vmatpush.msra.mxu0 0.0
      %398 = vmatpush.msra.mxu0 0.0
      %399 = vmatpush.msra.mxu0 0.0
      %400 = vmatpush.msra.mxu0 0.0
      %401 = vmatpush.msra.mxu0 0.0
      %402 = vmatpush.msra.mxu0 0.0
      %403 = vmatpush.msra.mxu0 %v379
      %404 = vmatpush.msra.mxu0 %v378
      %405 = vmatpush.msra.mxu0 %v377
      %406 = vmatpush.msra.mxu0 %v376
      %407 = vmatmul.f32.gmra.mxu0 %v386
      %v408 = vpop.f32.mrf.mxu0
      %v409 = vadd.f32 %v382, %v408
      %410 = vmatmul.f32.gmra.mxu0 %v389
      %v411 = vpop.f32.mrf.mxu0
      %v412 = vadd.f32 %v382, %v411
      %413 = vdwg.mxu0
      %v414 = vmax.f32 %v409, 0.0
      %v415 = vmax.f32 %v412, 0.0
      %v416 = vld [vmem:[%s5] sm:$0xff]
      %v417 = vld [vmem:[%s5 + $0x8] sm:$0xff]
      %v418 = vld [vmem:[%s5 + $0x10] sm:$0xff]
      %v419 = vld [vmem:[%s5 + $0x18] sm:$0xff]
      %v420 = vld [vmem:[%s6] sm:$0x1]
      %v422 = vperm.slane %v420, 0
      %v425 = vsel %vm384, %v414, 0
      %v428 = vsel %vm384, %v415, 0
      %430 = vmatpush.msra.mxu0 0.0
      %431 = vmatpush.msra.mxu0 0.0
      %432 = vmatpush.msra.mxu0 0.0
      %433 = vmatpush.msra.mxu0 0.0
      %434 = vmatpush.msra.mxu0 0.0
      %435 = vmatpush.msra.mxu0 0.0
      %436 = vmatpush.msra.mxu0 0.0
      %437 = vmatpush.msra.mxu0 0.0
      %438 = vmatpush.msra.mxu0 0.0
      %439 = vmatpush.msra.mxu0 0.0
      %440 = vmatpush.msra.mxu0 0.0
      %441 = vmatpush.msra.mxu0 0.0
      %442 = vmatpush.msra.mxu0 %v419
      %443 = vmatpush.msra.mxu0 %v418
      %444 = vmatpush.msra.mxu0 %v417
      %445 = vmatpush.msra.mxu0 %v416
      %446 = vmatmul.f32.gmra.mxu0 %v425
      %v447 = vpop.f32.mrf.mxu0
      %v448 = vadd.f32 %v422, %v447
      %449 = vmatmul.f32.gmra.mxu0 %v428
      %v450 = vpop.f32.mrf.mxu0
      %v451 = vadd.f32 %v422, %v450
      %452 = vdwg.mxu0
      %v453 = vmax.f32 %v448, 0.0
      %v454 = vmax.f32 %v451, 0.0
      %v455 = vld [vmem:[%s7] sm:$0xff]
      %v456 = vld [vmem:[%s7 + $0x8] sm:$0xff]
      %v457 = vld [vmem:[%s8] sm:$0x1]
      %v459 = vperm.slane %v457, 0
      %v462 = vsel %vm344, %v453, 0
      %v465 = vsel %vm344, %v454, 0
      %467 = vmatpush.msra.mxu0 0.0
      %468 = vmatpush.msra.mxu0 0.0
      %469 = vmatpush.msra.mxu0 0.0
      %470 = vmatpush.msra.mxu0 0.0
      %471 = vmatpush.msra.mxu0 0.0
      %472 = vmatpush.msra.mxu0 0.0
      %473 = vmatpush.msra.mxu0 0.0
      %474 = vmatpush.msra.mxu0 0.0
      %475 = vmatpush.msra.mxu0 0.0
      %476 = vmatpush.msra.mxu0 0.0
      %477 = vmatpush.msra.mxu0 0.0
      %478 = vmatpush.msra.mxu0 0.0
      %479 = vmatpush.msra.mxu0 0.0
      %480 = vmatpush.msra.mxu0 0.0
      %481 = vmatpush.msra.mxu0 %v456
      %482 = vmatpush.msra.mxu0 %v455
      %483 = vmatmul.f32.gmra.mxu0 %v462
      %v484 = vpop.f32.mrf.mxu0
      %v485 = vadd.f32 %v459, %v484
      %486 = vmatmul.f32.gmra.mxu0 %v465
      %v487 = vpop.f32.mrf.mxu0
      %v488 = vadd.f32 %v459, %v487
      %489 = vdwg.mxu0
      %vm490 = vcmask 15360
      %491 = vst.msk [vmem:[%s334] sm:$0xff] %vm490, %v485
      %492 = vst.msk [vmem:[%s334 + $0x8] sm:$0xff] %vm490, %v488
      %s493 = smul.u32 2, %s20
      %p494 = scmp.lt.s32.totalorder %s493, 7
      %s495 = scalar_select %p494, %s493, 7
      %s496 = smul.addr %s495, 8
      %s497 = scalar_lea.vmem %s9, %s496
      // Predicated region
      $region57: #{mlp_localization_forward.1} parent=55 // pred_check
        %p498 = pneg %p232
      $region58: #{mlp_localization_forward.1} parent=55 // pred_check_branch
        %500 = sbr.rel (%p498) target = $region60
      $region59: #{mlp_localization_forward.1} parent=55 // pred_region
        %s501 = smul.u32 2, %s20
      $region60: #{mlp_localization_forward.1} parent=55 // pred_fallthru
        _
    $region56: #{mlp_localization_forward.1} parent=5 // pred_fallthru
      _
    %p502 = scmp.le.s32.totalorder 2, %s15
    // Predicated region
    $region61: #{mlp_localization_forward.1} parent=5 // pred_check
      %p503 = pneg %p502
    $region62: #{mlp_localization_forward.1} parent=5 // pred_check_branch
      %505 = sbr.rel (%p503) target = $region64
    $region63: #{mlp_localization_forward.1} parent=5 // pred_region
      %s506 = ssub.s32 %s15, 2
      // Predicated region
      $region65: #{mlp_localization_forward.1} parent=63 // pred_check
        %p507 = pneg %p238
      $region66: #{mlp_localization_forward.1} parent=63 // pred_check_branch
        %509 = sbr.rel (%p507) target = $region68
      $region67: #{mlp_localization_forward.1} parent=63 // pred_region
        %s510 = smul.u32 2, %s21
        %p511 = scmp.lt.s32.totalorder %s510, 7
        %s512 = scalar_select %p511, %s510, 7
        %s513 = smul.addr %s512, 8
        %s514 = scalar_lea.vmem %s9, %s513
      $region68: #{mlp_localization_forward.1} parent=63 // pred_fallthru
        _
    $region64: #{mlp_localization_forward.1} parent=5 // pred_fallthru
      _
  $region6: #{mlp_localization_forward.1} parent=0 // loop_footer
    %s19 = sadd.s32 1, %s15
  $region7: #{mlp_localization_forward.1} parent=0 // loop_footer_branch
    %14 = sbr.rel target = $region3
  $region8: #{mlp_localization_forward.1} parent=0 // loop_exit
    _

</llo_original>
